<compile_context>
chip_gen: v5e
topology: v5e:2x2
jax: 0.10.0
libtpu: 0.0.40
codegen_flags: <defaults>
</compile_context>

<pallas_src>
import functools

import jax
import jax.numpy as jnp
from jax.experimental import pallas as pl
from jax.experimental.pallas import tpu as pltpu

NEG_SLOPE = 0.01  # F.leaky_relu default


def _leaky(x):
    return jnp.where(x >= 0, x, NEG_SLOPE * x)


def _round_up(n, m):
    return ((n + m - 1) // m) * m


# --------------------------------- kernel ------------------------------------
def leafgeo_kernel(x_ref, wa_ref, w2_ref, w3_ref, b_ref, o_ref):
    """x_ref : (TB, Fp)      bf16
       wa_ref: (Fp, Hp+Op)   bf16   packed [W1 | Wskip]
       w2_ref: (Hp, Hp)      bf16
       w3_ref: (Hp, Op)      bf16
       b_ref : (8, Hp+Op)    f32    row0=[b1|bskip], row1=[b2|0], row2=[b3|0]
       o_ref : (TB, Op)      f32
    """
    Hp = w2_ref.shape[0]
    Op = o_ref.shape[1]

    # Fused mlp1 | skip: one MXU call with N = Hp+Op, one broadcast bias add
    # for the fused [b1 | bskip] row.
    hs = jnp.dot(x_ref[...], wa_ref[...],
                 preferred_element_type=jnp.float32) + b_ref[0:1, :]

    # Park the skip stream in the output block (VMEM) immediately so its
    # vregs are not live across the mlp2 -> mlp3 chain (register pressure).
    o_ref[...] = hs[:, Hp:Hp + Op]

    h = _leaky(hs[:, 0:Hp])
    h = _leaky(jnp.dot(h.astype(w2_ref.dtype), w2_ref[...],
                       preferred_element_type=jnp.float32) + b_ref[1:2, 0:Hp])
    o_ref[...] += (jnp.dot(h.astype(w3_ref.dtype), w3_ref[...],
                           preferred_element_type=jnp.float32)
                   + b_ref[2:3, 0:Op])


# -------------------------------- wrapper -------------------------------------
def _pad2(a, rows, cols, dtype):
    out = jnp.zeros((rows, cols), dtype)
    return out.at[:a.shape[0], :a.shape[1]].set(a.astype(dtype))


@functools.partial(jax.jit, static_argnames=("tile_b", "weight_dtype"))
def leafgeo_forward(x, params, *, tile_b=None, weight_dtype=jnp.bfloat16):
    """x: (B, F) f32.

    params: PyTorch-layout tensors {w1,b1,w2,b2,w3,b3,wskip,bskip} with each
    weight of shape (out_features, in_features) and each bias of shape (out,).
    """
    B, F = x.shape
    H = params["w1"].shape[0]
    O = params["w3"].shape[0]
    Fp, Hp, Op = _round_up(F, 128), _round_up(H, 128), _round_up(O, 128)
    Na = Hp + Op                       # fused mlp1|skip output width

    if tile_b is None:
        # Sweep guidance: 256-1024 amortizes the ~0.35us/step overhead on
        # v5e/v6e (single TC, serial grid); on v7x keep >= 2 "parallel" tiles
        # so both TensorCores get balanced work.
        tile_b = 128 if B <= 512 else 512
    Bp = _round_up(max(B, tile_b), tile_b)

    wd = weight_dtype
    # [W1 | Wskip] packed along N (both consume x, common K = Fp).
    wa = jnp.concatenate(
        [_pad2(jnp.asarray(params["w1"]).T, Fp, Hp, wd),
         _pad2(jnp.asarray(params["wskip"]).T, Fp, Op, wd)], axis=1)   # (Fp, Na)
    w2 = _pad2(jnp.asarray(params["w2"]).T, Hp, Hp, wd)                # (Hp, Hp)
    w3 = _pad2(jnp.asarray(params["w3"]).T, Hp, Op, wd)                # (Hp, Op)

    b = jnp.zeros((8, Na), jnp.float32)
    b = b.at[0, :H].set(jnp.asarray(params["b1"], jnp.float32))        # fused
    b = b.at[0, Hp:Hp + O].set(jnp.asarray(params["bskip"], jnp.float32))
    b = b.at[1, :H].set(jnp.asarray(params["b2"], jnp.float32))
    b = b.at[2, :O].set(jnp.asarray(params["b3"], jnp.float32))

    # Batch-pad + bf16 cast fused into this jit (no separate HBM round-trip).
    x_pad = jnp.zeros((Bp, Fp), wd).at[:B, :F].set(x.astype(wd))

    resident = dict(pipeline_mode=pl.Buffered(1))   # constant index_map inputs
    out = pl.pallas_call(
        leafgeo_kernel,
        out_shape=jax.ShapeDtypeStruct((Bp, Op), jnp.float32),
        grid=(Bp // tile_b,),
        in_specs=[
            pl.BlockSpec((tile_b, Fp), lambda i: (i, 0)),       # activations
            pl.BlockSpec((Fp, Na), lambda i: (0, 0), **resident),  # [W1|Wskip]
            pl.BlockSpec((Hp, Hp), lambda i: (0, 0), **resident),  # W2
            pl.BlockSpec((Hp, Op), lambda i: (0, 0), **resident),  # W3
            pl.BlockSpec((8, Na), lambda i: (0, 0), **resident),   # biases
        ],
        out_specs=pl.BlockSpec((tile_b, Op), lambda i: (i, 0)),
        compiler_params=pltpu.CompilerParams(
            dimension_semantics=("parallel",)),
    )(x_pad, wa, w2, w3, b)

    return out[:B, :O]


# ------------------------------- pure-JAX ref ----------------------------------
def reference(x, params):
    h = _leaky(x @ params["w1"].T + params["b1"])
    h = _leaky(h @ params["w2"].T + params["b2"])
    return (x @ params["wskip"].T + params["bskip"]
            + h @ params["w3"].T + params["b3"])


# ---------------------------------- main ---------------------------------------
if __name__ == "__main__":
    key = jax.random.PRNGKey(0)
    F_IN, HIDDEN, F_OUT = 64, 128, 96
    B = 200

    ks = jax.random.split(key, 9)

    def lin(kw, kb, din, dout):
        w = jax.random.normal(kw, (dout, din), jnp.float32) / jnp.sqrt(float(din))
        b = 0.1 * jax.random.normal(kb, (dout,), jnp.float32)
        return w, b

    w1, b1 = lin(ks[0], ks[1], F_IN, HIDDEN)        # mlp1
    w2, b2 = lin(ks[2], ks[3], HIDDEN, HIDDEN)      # mlp2
    w3, b3 = lin(ks[4], ks[5], HIDDEN, F_OUT)       # mlp3
    wskip, bskip = lin(ks[6], ks[7], F_IN, F_OUT)   # skip
    params = dict(w1=w1, b1=b1, w2=w2, b2=b2, w3=w3, b3=b3,
                  wskip=wskip, bskip=bskip)

    x = jax.random.normal(ks[8], (B, F_IN), jnp.float32)

    out = leafgeo_forward(x, params)
    jax.block_until_ready(out)

    ref = reference(x, params)
    assert out.shape == (B, F_OUT), out.shape
    max_err = float(jnp.abs(out - ref).max())
    # bf16 storage (deliberate, per perf review) => ~1e-2-level absolute error
    # vs the f32 reference at these magnitudes.
    assert jnp.allclose(out, ref, atol=1e-1, rtol=2e-2), max_err
    print("KERNEL_OK")
</pallas_src>

<mosaic_0001>
module attributes {stable_mosaic.version = 11 : i64} {
  func.func @leafgeo_kernel(%arg0: i32, %arg1: memref<128x128xbf16, #tpu.memory_space<vmem>>, %arg2: memref<128x256xbf16, #tpu.memory_space<vmem>>, %arg3: memref<128x128xbf16, #tpu.memory_space<vmem>>, %arg4: memref<128x128xbf16, #tpu.memory_space<vmem>>, %arg5: memref<8x256xf32, #tpu.memory_space<vmem>>, %arg6: memref<128x128xf32, #tpu.memory_space<vmem>>) attributes {dimension_semantics = [#tpu.dimension_semantics<parallel>], iteration_bounds = array<i64: 2>, scalar_prefetch = 0 : i64, scratch_operands = 0 : i64, tpu.core_type = #tpu.core_type<tc>, window_params = [{transform_indices = @transform_0, window_bounds = array<i64: 128, 128>}, {pipeline_mode = #tpu.pipeline_mode<synchronous>, transform_indices = @transform_1, window_bounds = array<i64: 128, 256>}, {pipeline_mode = #tpu.pipeline_mode<synchronous>, transform_indices = @transform_2, window_bounds = array<i64: 128, 128>}, {pipeline_mode = #tpu.pipeline_mode<synchronous>, transform_indices = @transform_3, window_bounds = array<i64: 128, 128>}, {pipeline_mode = #tpu.pipeline_mode<synchronous>, transform_indices = @transform_4, window_bounds = array<i64: 8, 256>}, {transform_indices = @transform_5, window_bounds = array<i64: 128, 128>}]} {
    %c0 = arith.constant 0 : index
    %c0_0 = arith.constant 0 : index
    %0 = vector.load %arg1[%c0, %c0_0] : memref<128x128xbf16, #tpu.memory_space<vmem>>, vector<128x128xbf16>
    %c0_1 = arith.constant 0 : index
    %c0_2 = arith.constant 0 : index
    %1 = vector.load %arg2[%c0_1, %c0_2] : memref<128x256xbf16, #tpu.memory_space<vmem>>, vector<128x256xbf16>
    %cst = arith.constant dense<0.000000e+00> : vector<128x256xf32>
    %2 = tpu.matmul %0, %1, %cst {dimension_numbers = #tpu.dot_dimension_numbers<[1], [0], [0], [1], [0, 0, 1, 1], [], []>} : vector<128x128xbf16>, vector<128x256xbf16>, vector<128x256xf32> -> vector<128x256xf32>
    %c0_3 = arith.constant 0 : index
    %c0_4 = arith.constant 0 : index
    %3 = vector.load %arg5[%c0_3, %c0_4] : memref<8x256xf32, #tpu.memory_space<vmem>>, vector<1x256xf32>
    %4 = vector.broadcast %3 : vector<1x256xf32> to vector<128x256xf32>
    %5 = arith.addf %2, %4 : vector<128x256xf32>
    %6 = vector.extract_strided_slice %5 {offsets = [0, 128], sizes = [128, 128], strides = [1, 1]} : vector<128x256xf32> to vector<128x128xf32>
    %c0_5 = arith.constant 0 : index
    %c0_6 = arith.constant 0 : index
    %7 = vector.load %arg6[%c0_5, %c0_6] : memref<128x128xf32, #tpu.memory_space<vmem>>, vector<128x128xf32>
    tpu.vector_store %arg6[%c0_5, %c0_6], %6 {strides = array<i32>} : memref<128x128xf32, #tpu.memory_space<vmem>>, vector<128x128xf32>,
    %8 = vector.extract_strided_slice %5 {offsets = [0, 0], sizes = [128, 128], strides = [1, 1]} : vector<128x256xf32> to vector<128x128xf32>
    %cst_7 = arith.constant 0.000000e+00 : f32
    %9 = vector.broadcast %cst_7 : f32 to vector<128x128xf32>
    %10 = arith.cmpf oge, %8, %9 : vector<128x128xf32>
    %cst_8 = arith.constant 0.00999999977 : f32
    %11 = vector.broadcast %cst_8 : f32 to vector<128x128xf32>
    %12 = arith.mulf %11, %8 : vector<128x128xf32>
    %13 = arith.select %10, %8, %12 : vector<128x128xi1>, vector<128x128xf32>
    %14 = arith.truncf %13 : vector<128x128xf32> to vector<128x128xbf16>
    %c0_9 = arith.constant 0 : index
    %c0_10 = arith.constant 0 : index
    %15 = vector.load %arg3[%c0_9, %c0_10] : memref<128x128xbf16, #tpu.memory_space<vmem>>, vector<128x128xbf16>
    %cst_11 = arith.constant dense<0.000000e+00> : vector<128x128xf32>
    %16 = tpu.matmul %14, %15, %cst_11 {dimension_numbers = #tpu.dot_dimension_numbers<[1], [0], [0], [1], [0, 0, 1, 1], [], []>} : vector<128x128xbf16>, vector<128x128xbf16>, vector<128x128xf32> -> vector<128x128xf32>
    %c1 = arith.constant 1 : index
    %c0_12 = arith.constant 0 : index
    %17 = vector.load %arg5[%c1, %c0_12] : memref<8x256xf32, #tpu.memory_space<vmem>>, vector<1x128xf32>
    %18 = vector.broadcast %17 : vector<1x128xf32> to vector<128x128xf32>
    %19 = arith.addf %16, %18 : vector<128x128xf32>
    %cst_13 = arith.constant 0.000000e+00 : f32
    %20 = vector.broadcast %cst_13 : f32 to vector<128x128xf32>
    %21 = arith.cmpf oge, %19, %20 : vector<128x128xf32>
    %cst_14 = arith.constant 0.00999999977 : f32
    %22 = vector.broadcast %cst_14 : f32 to vector<128x128xf32>
    %23 = arith.mulf %22, %19 : vector<128x128xf32>
    %24 = arith.select %21, %19, %23 : vector<128x128xi1>, vector<128x128xf32>
    %c0_15 = arith.constant 0 : index
    %c0_16 = arith.constant 0 : index
    %25 = vector.load %arg6[%c0_15, %c0_16] : memref<128x128xf32, #tpu.memory_space<vmem>>, vector<128x128xf32>
    %26 = arith.truncf %24 : vector<128x128xf32> to vector<128x128xbf16>
    %c0_17 = arith.constant 0 : index
    %c0_18 = arith.constant 0 : index
    %27 = vector.load %arg4[%c0_17, %c0_18] : memref<128x128xbf16, #tpu.memory_space<vmem>>, vector<128x128xbf16>
    %cst_19 = arith.constant dense<0.000000e+00> : vector<128x128xf32>
    %28 = tpu.matmul %26, %27, %cst_19 {dimension_numbers = #tpu.dot_dimension_numbers<[1], [0], [0], [1], [0, 0, 1, 1], [], []>} : vector<128x128xbf16>, vector<128x128xbf16>, vector<128x128xf32> -> vector<128x128xf32>
    %c2 = arith.constant 2 : index
    %c0_20 = arith.constant 0 : index
    %29 = vector.load %arg5[%c2, %c0_20] : memref<8x256xf32, #tpu.memory_space<vmem>>, vector<1x128xf32>
    %30 = vector.broadcast %29 : vector<1x128xf32> to vector<128x128xf32>
    %31 = arith.addf %28, %30 : vector<128x128xf32>
    %32 = arith.addf %25, %31 : vector<128x128xf32>
    %c0_21 = arith.constant 0 : index
    %c0_22 = arith.constant 0 : index
    %33 = vector.load %arg6[%c0_21, %c0_22] : memref<128x128xf32, #tpu.memory_space<vmem>>, vector<128x128xf32>
    tpu.vector_store %arg6[%c0_21, %c0_22], %32 {strides = array<i32>} : memref<128x128xf32, #tpu.memory_space<vmem>>, vector<128x128xf32>,
    return
  }
  func.func @transform_0(%arg0: i32) -> (i32, i32) {
    %c0_i32 = arith.constant 0 : i32
    %c0_i32_0 = arith.constant 0 : i32
    return %arg0, %c0_i32 : i32, i32
  }
  func.func @transform_1(%arg0: i32) -> (i32, i32) {
    %c0_i32 = arith.constant 0 : i32
    %c0_i32_0 = arith.constant 0 : i32
    %c0_i32_1 = arith.constant 0 : i32
    return %c0_i32, %c0_i32_0 : i32, i32
  }
  func.func @transform_2(%arg0: i32) -> (i32, i32) {
    %c0_i32 = arith.constant 0 : i32
    %c0_i32_0 = arith.constant 0 : i32
    %c0_i32_1 = arith.constant 0 : i32
    return %c0_i32, %c0_i32_0 : i32, i32
  }
  func.func @transform_3(%arg0: i32) -> (i32, i32) {
    %c0_i32 = arith.constant 0 : i32
    %c0_i32_0 = arith.constant 0 : i32
    %c0_i32_1 = arith.constant 0 : i32
    return %c0_i32, %c0_i32_0 : i32, i32
  }
  func.func @transform_4(%arg0: i32) -> (i32, i32) {
    %c0_i32 = arith.constant 0 : i32
    %c0_i32_0 = arith.constant 0 : i32
    %c0_i32_1 = arith.constant 0 : i32
    return %c0_i32, %c0_i32_0 : i32, i32
  }
  func.func @transform_5(%arg0: i32) -> (i32, i32) {
    %c0_i32 = arith.constant 0 : i32
    %c0_i32_0 = arith.constant 0 : i32
    return %arg0, %c0_i32 : i32, i32
  }
}

</mosaic_0001>

<llo_original>
// kernel: leafgeo_forward.1
$region0: #{leafgeo_forward.1}
  #allocation0 [shape = 'u32[]', space=smem, size = 0x4, offset = 0x4, fixed_abs, tag = 'smem constant byte address 0x4 - core index']
  #allocation1 [shape = 'u32[72,128]{1,0:T(1,128)}', space=vmem, size = 0x9000, scoped, tag = 'internal scratch']
  %s0 = inlined_call_operand.vmem [shape: bf16[256,128], index: 0, kind: input, shape index: {}]
  %s1 = inlined_call_operand.vmem [shape: bf16[128,256], index: 1, kind: input, shape index: {}]
  %s2 = inlined_call_operand.vmem [shape: bf16[128,128], index: 2, kind: input, shape index: {}]
  %s3 = inlined_call_operand.vmem [shape: bf16[128,128], index: 3, kind: input, shape index: {}]
  %s4 = inlined_call_operand.vmem [shape: f32[8,256], index: 4, kind: input, shape index: {}]
  %s5 = inlined_call_operand.vmem [shape: f32[256,128], index: 5, kind: output, shape index: {}]
  %s6 = sld [smem:[#allocation0]]
  $region53: #{leafgeo_forward.1} parent=0
    _
  %s8 = ssub.s32 1, %s6
  %s9 = scalar_select 0, %s8, %s6
  loop: start=0, step=1, limit=4
  $region2: #{leafgeo_forward.1} parent=0 // loop_pre_header
    _
  $region3: #{leafgeo_forward.1} parent=0 // loop_header
    %s11 = sphi 0, %s15
    %p12 = scmp.ge.s32.totalorder %s11, 4
    %s21 = sphi 0, %s23
    %s24 = sphi 0, %s21
    %s25 = sphi 0, %s24
    %s41 = sphi 0, %s25
    %s45 = sphi 0, %s45
    %s47 = sphi 0, %s45
    %s48 = sphi 0, %s47
    %s62 = sphi 0, %s48
    %s66 = sphi 0, %s66
    %s68 = sphi 0, %s66
    %s69 = sphi 0, %s68
    %s83 = sphi 0, %s69
    %s87 = sphi 0, %s87
    %s89 = sphi 0, %s87
    %s90 = sphi 0, %s89
    %s104 = sphi 0, %s90
    %s108 = sphi 0, %s108
    %s110 = sphi 0, %s108
    %s111 = sphi 0, %s110
    %s125 = sphi 0, %s111
    %s131 = sphi 0, %s133
    %s134 = sphi 0, %s131
    %s135 = sphi 0, %s134
    %s151 = sphi 0, %s135
  $region4: #{leafgeo_forward.1} parent=0 // loop_header_branch
    %14 = sbr.rel (%p12) target = $region8
  $region5: #{leafgeo_forward.1} parent=0 // loop_body
    %s16 = ssub.s32 %s11, 1
    %s17 = ssub.s32 %s11, 2
    %s18 = sadd.s32 %s11, 1
    %s19 = ssub.s32 %s11, %s18
    %p20 = scmp.eq.s32.totalorder %s19, 0
    %s22 = sadd.s32 %s21, 1
    %s23 = scalar_select %p20, %s21, %s22
    %p26 = pneg %p20
    %p27 = scmp.eq.s32.totalorder %s11, 1
    %p28 = por %p26, %p27
    %p29 = scmp.ne.s32.totalorder %s21, %s24
    %p30 = scmp.eq.s32.totalorder %s11, 0
    %p31 = por %p29, %p30
    %p32 = scmp.ne.s32.totalorder %s21, %s24
    %p33 = scmp.eq.s32.totalorder %s16, 1
    %p34 = por %p32, %p33
    %p35 = scmp.ne.s32.totalorder %s24, %s25
    %p36 = scmp.eq.s32.totalorder %s16, 0
    %p37 = por %p35, %p36
    %p38 = scmp.ne.s32.totalorder %s24, %s25
    %p39 = scmp.eq.s32.totalorder %s17, 1
    %p40 = por %p38, %p39
    %p42 = scmp.ne.s32.totalorder %s25, %s41
    %p43 = scmp.eq.s32.totalorder %s17, 0
    %p44 = por %p42, %p43
    %s46 = sadd.s32 %s45, 1
    %p49 = scmp.eq.s32.totalorder %s11, 1
    %p50 = scmp.ne.s32.totalorder %s45, %s47
    %p51 = scmp.eq.s32.totalorder %s11, 0
    %p52 = por %p50, %p51
    %p53 = scmp.ne.s32.totalorder %s45, %s47
    %p54 = scmp.eq.s32.totalorder %s16, 1
    %p55 = por %p53, %p54
    %p56 = scmp.ne.s32.totalorder %s47, %s48
    %p57 = scmp.eq.s32.totalorder %s16, 0
    %p58 = por %p56, %p57
    %p59 = scmp.ne.s32.totalorder %s47, %s48
    %p60 = scmp.eq.s32.totalorder %s17, 1
    %p61 = por %p59, %p60
    %p63 = scmp.ne.s32.totalorder %s48, %s62
    %p64 = scmp.eq.s32.totalorder %s17, 0
    %p65 = por %p63, %p64
    %s67 = sadd.s32 %s66, 1
    %p70 = scmp.eq.s32.totalorder %s11, 1
    %p71 = scmp.ne.s32.totalorder %s66, %s68
    %p72 = scmp.eq.s32.totalorder %s11, 0
    %p73 = por %p71, %p72
    %p74 = scmp.ne.s32.totalorder %s66, %s68
    %p75 = scmp.eq.s32.totalorder %s16, 1
    %p76 = por %p74, %p75
    %p77 = scmp.ne.s32.totalorder %s68, %s69
    %p78 = scmp.eq.s32.totalorder %s16, 0
    %p79 = por %p77, %p78
    %p80 = scmp.ne.s32.totalorder %s68, %s69
    %p81 = scmp.eq.s32.totalorder %s17, 1
    %p82 = por %p80, %p81
    %p84 = scmp.ne.s32.totalorder %s69, %s83
    %p85 = scmp.eq.s32.totalorder %s17, 0
    %p86 = por %p84, %p85
    %s88 = sadd.s32 %s87, 1
    %p91 = scmp.eq.s32.totalorder %s11, 1
    %p92 = scmp.ne.s32.totalorder %s87, %s89
    %p93 = scmp.eq.s32.totalorder %s11, 0
    %p94 = por %p92, %p93
    %p95 = scmp.ne.s32.totalorder %s87, %s89
    %p96 = scmp.eq.s32.totalorder %s16, 1
    %p97 = por %p95, %p96
    %p98 = scmp.ne.s32.totalorder %s89, %s90
    %p99 = scmp.eq.s32.totalorder %s16, 0
    %p100 = por %p98, %p99
    %p101 = scmp.ne.s32.totalorder %s89, %s90
    %p102 = scmp.eq.s32.totalorder %s17, 1
    %p103 = por %p101, %p102
    %p105 = scmp.ne.s32.totalorder %s90, %s104
    %p106 = scmp.eq.s32.totalorder %s17, 0
    %p107 = por %p105, %p106
    %s109 = sadd.s32 %s108, 1
    %p112 = scmp.eq.s32.totalorder %s11, 1
    %p113 = scmp.ne.s32.totalorder %s108, %s110
    %p114 = scmp.eq.s32.totalorder %s11, 0
    %p115 = por %p113, %p114
    %p116 = scmp.ne.s32.totalorder %s108, %s110
    %p117 = scmp.eq.s32.totalorder %s16, 1
    %p118 = por %p116, %p117
    %p119 = scmp.ne.s32.totalorder %s110, %s111
    %p120 = scmp.eq.s32.totalorder %s16, 0
    %p121 = por %p119, %p120
    %p122 = scmp.ne.s32.totalorder %s110, %s111
    %p123 = scmp.eq.s32.totalorder %s17, 1
    %p124 = por %p122, %p123
    %p126 = scmp.ne.s32.totalorder %s111, %s125
    %p127 = scmp.eq.s32.totalorder %s17, 0
    %p128 = por %p126, %p127
    %s129 = ssub.s32 %s11, %s18
    %p130 = scmp.eq.s32.totalorder %s129, 0
    %s132 = sadd.s32 %s131, 1
    %s133 = scalar_select %p130, %s131, %s132
    %p136 = pneg %p130
    %p137 = scmp.eq.s32.totalorder %s11, 1
    %p138 = por %p136, %p137
    %p139 = scmp.ne.s32.totalorder %s131, %s134
    %p140 = scmp.eq.s32.totalorder %s11, 0
    %p141 = por %p139, %p140
    %p142 = scmp.ne.s32.totalorder %s131, %s134
    %p143 = scmp.eq.s32.totalorder %s16, 1
    %p144 = por %p142, %p143
    %p145 = scmp.ne.s32.totalorder %s134, %s135
    %p146 = scmp.eq.s32.totalorder %s16, 0
    %p147 = por %p145, %p146
    %p148 = scmp.ne.s32.totalorder %s134, %s135
    %p149 = scmp.eq.s32.totalorder %s17, 1
    %p150 = por %p148, %p149
    %p152 = scmp.ne.s32.totalorder %s135, %s151
    %p153 = scmp.eq.s32.totalorder %s17, 0
    %p154 = por %p152, %p153
    %p155 = scmp.le.s32.totalorder 1, %s11
    %p156 = scmp.lt.s32.totalorder %s11, 3
    %p157 = pnand %p155, %p156
    %p158 = pneg %p157
    // Predicated region
    $region9: #{leafgeo_forward.1} parent=5 // pred_check
      _
    $region10: #{leafgeo_forward.1} parent=5 // pred_check_branch
      %160 = sbr.rel (%p157) target = $region12
    $region11: #{leafgeo_forward.1} parent=5 // pred_region
      %s161 = ssub.s32 %s11, 1
      // Predicated region
      $region13: #{leafgeo_forward.1} parent=11 // pred_check
        %p162 = pneg %p58
      $region14: #{leafgeo_forward.1} parent=11 // pred_check_branch
        %164 = sbr.rel (%p162) target = $region16
      $region15: #{leafgeo_forward.1} parent=11 // pred_region
        _
      $region16: #{leafgeo_forward.1} parent=11 // pred_fallthru
        _
      // Predicated region
      $region17: #{leafgeo_forward.1} parent=11 // pred_check
        %p165 = pneg %p79
      $region18: #{leafgeo_forward.1} parent=11 // pred_check_branch
        %167 = sbr.rel (%p165) target = $region20
      $region19: #{leafgeo_forward.1} parent=11 // pred_region
        _
      $region20: #{leafgeo_forward.1} parent=11 // pred_fallthru
        _
      // Predicated region
      $region21: #{leafgeo_forward.1} parent=11 // pred_check
        %p168 = pneg %p100
      $region22: #{leafgeo_forward.1} parent=11 // pred_check_branch
        %170 = sbr.rel (%p168) target = $region24
      $region23: #{leafgeo_forward.1} parent=11 // pred_region
        _
      $region24: #{leafgeo_forward.1} parent=11 // pred_fallthru
        _
      // Predicated region
      $region25: #{leafgeo_forward.1} parent=11 // pred_check
        %p171 = pneg %p121
      $region26: #{leafgeo_forward.1} parent=11 // pred_check_branch
        %173 = sbr.rel (%p171) target = $region28
      $region27: #{leafgeo_forward.1} parent=11 // pred_region
        _
      $region28: #{leafgeo_forward.1} parent=11 // pred_fallthru
        _
    $region12: #{leafgeo_forward.1} parent=5 // pred_fallthru
      _
    %p174 = scmp.lt.s32.totalorder %s11, 2
    // Predicated region
    $region29: #{leafgeo_forward.1} parent=5 // pred_check
      %p175 = pneg %p174
    $region30: #{leafgeo_forward.1} parent=5 // pred_check_branch
      %177 = sbr.rel (%p175) target = $region32
    $region31: #{leafgeo_forward.1} parent=5 // pred_region
      // Predicated region
      $region33: #{leafgeo_forward.1} parent=31 // pred_check
        %p178 = pneg %p31
      $region34: #{leafgeo_forward.1} parent=31 // pred_check_branch
        %180 = sbr.rel (%p178) target = $region36
      $region35: #{leafgeo_forward.1} parent=31 // pred_region
        %s181 = smul.u32 16, %s11
        %p182 = scmp.lt.s32.totalorder %s181, 31
        %s183 = scalar_select %p182, %s181, 31
        %s184 = smul.addr %s183, 4
        %s185 = scalar_lea.vmem %s0, %s184
        %s186 = smul.u32 16, %s11
      $region36: #{leafgeo_forward.1} parent=31 // pred_fallthru
        _
    $region32: #{leafgeo_forward.1} parent=5 // pred_fallthru
      _
    %p187 = scmp.le.s32.totalorder 1, %s11
    %p188 = scmp.lt.s32.totalorder %s11, 3
    %p189 = pnand %p187, %p188
    %p190 = pneg %p189
    // Predicated region
    $region37: #{leafgeo_forward.1} parent=5 // pred_check
      _
    $region38: #{leafgeo_forward.1} parent=5 // pred_check_branch
      %192 = sbr.rel (%p189) target = $region40
    $region39: #{leafgeo_forward.1} parent=5 // pred_region
      %s193 = ssub.s32 %s11, 1
      %s194 = smul.u32 16, %s16
      %p195 = scmp.lt.s32.totalorder %s194, 31
      %s196 = scalar_select %p195, %s194, 31
      %s197 = smul.addr %s196, 4
      %s198 = scalar_lea.vmem %s0, %s197
      %p199 = pneg %p37
      %p200 = pneg %p34
      %p201 = pneg %p58
      %p202 = pneg %p55
      %p203 = pneg %p79
      %p204 = pneg %p76
      %p205 = pneg %p100
      %p206 = pneg %p97
      %p207 = pneg %p121
      %p208 = pneg %p118
      %p209 = pneg %p147
      %p210 = pneg %p144
      %s211 = smul.u32 16, %s16
      %p212 = scmp.lt.s32.totalorder %s211, 31
      %s213 = scalar_select %p212, %s211, 31
      %s214 = smul.addr %s213, 8
      %s215 = scalar_lea.vmem %s5, %s214
      %s216 = smul.u32 16, %s16
      %p217 = scmp.lt.s32.totalorder %s216, 31
      %s218 = scalar_select %p217, %s216, 31
      %s219 = smul.addr %s218, 4
      %s220 = scalar_lea.vmem %s0, %s219
      %s221 = smul.u32 16, %s16
      %s222 = smul.u32 16, %s16
      %p223 = scmp.lt.s32.totalorder %s222, 31
      %s224 = scalar_select %p223, %s222, 31
      %s225 = smul.addr %s224, 8
      %s226 = scalar_lea.vmem %s5, %s225
      %s227 = smul.u32 16, %s16
      %v228 = vld [vmem:[%s220] sm:$0xf]
      %v229 = vld [vmem:[%s220 + $0x4] sm:$0xf]
      %v230 = vld [vmem:[%s220 + $0x8] sm:$0xf]
      %v231 = vld [vmem:[%s220 + $0xc] sm:$0xf]
      %v232 = vld [vmem:[%s220 + $0x10] sm:$0xf]
      %v233 = vld [vmem:[%s220 + $0x14] sm:$0xf]
      %v234 = vld [vmem:[%s220 + $0x18] sm:$0xf]
      %v235 = vld [vmem:[%s220 + $0x1c] sm:$0xf]
      %v236 = vld [vmem:[%s220 + $0x20] sm:$0xf]
      %v237 = vld [vmem:[%s220 + $0x24] sm:$0xf]
      %v238 = vld [vmem:[%s220 + $0x28] sm:$0xf]
      %v239 = vld [vmem:[%s220 + $0x2c] sm:$0xf]
      %v240 = vld [vmem:[%s220 + $0x30] sm:$0xf]
      %v241 = vld [vmem:[%s220 + $0x34] sm:$0xf]
      %v242 = vld [vmem:[%s220 + $0x38] sm:$0xf]
      %v243 = vld [vmem:[%s220 + $0x3c] sm:$0xf]
      %v244 = vld [vmem:[%s1] sm:$0xff]
      %v245 = vld [vmem:[%s1 + $0x8] sm:$0xff]
      %v246 = vld [vmem:[%s1 + $0x10] sm:$0xff]
      %v247 = vld [vmem:[%s1 + $0x18] sm:$0xff]
      %v248 = vld [vmem:[%s1 + $0x20] sm:$0xff]
      %v249 = vld [vmem:[%s1 + $0x28] sm:$0xff]
      %v250 = vld [vmem:[%s1 + $0x30] sm:$0xff]
      %v251 = vld [vmem:[%s1 + $0x38] sm:$0xff]
      %v252 = vld [vmem:[%s1 + $0x40] sm:$0xff]
      %v253 = vld [vmem:[%s1 + $0x48] sm:$0xff]
      %v254 = vld [vmem:[%s1 + $0x50] sm:$0xff]
      %v255 = vld [vmem:[%s1 + $0x58] sm:$0xff]
      %v256 = vld [vmem:[%s1 + $0x60] sm:$0xff]
      %v257 = vld [vmem:[%s1 + $0x68] sm:$0xff]
      %v258 = vld [vmem:[%s1 + $0x70] sm:$0xff]
      %v259 = vld [vmem:[%s1 + $0x78] sm:$0xff]
      %v260 = vld [vmem:[%s4] ss:$8 sm:$0x3]
      %v262 = vperm.slane %v260, 0
      %v263 = vperm.slane %v260, 1
      %v282 = vunpack.c.l.b16 %v228
      %v283 = vunpack.c.l.b16 %v229
      %v284 = vunpack.c.l.b16 %v230
      %v285 = vunpack.c.l.b16 %v231
      %v286 = vunpack.c.l.b16 %v232
      %v287 = vunpack.c.l.b16 %v233
      %v288 = vunpack.c.l.b16 %v234
      %v289 = vunpack.c.l.b16 %v235
      %v290 = vunpack.c.l.b16 %v236
      %v291 = vunpack.c.l.b16 %v237
      %v292 = vunpack.c.l.b16 %v238
      %v293 = vunpack.c.l.b16 %v239
      %v294 = vunpack.c.l.b16 %v240
      %v295 = vunpack.c.l.b16 %v241
      %v296 = vunpack.c.l.b16 %v242
      %v297 = vunpack.c.l.b16 %v243
      %v298 = vpack.c.b16 %v283, %v282
      %v299 = vpack.c.b16 %v285, %v284
      %v300 = vpack.c.b16 %v287, %v286
      %v301 = vpack.c.b16 %v289, %v288
      %v302 = vpack.c.b16 %v291, %v290
      %v303 = vpack.c.b16 %v293, %v292
      %v304 = vpack.c.b16 %v295, %v294
      %v305 = vpack.c.b16 %v297, %v296
      %v330 = vunpack.c.l.b16 %v244
      %v331 = vunpack.c.h.b16 %v244
      %v332 = vunpack.c.l.b16 %v245
      %v333 = vunpack.c.h.b16 %v245
      %v334 = vunpack.c.l.b16 %v246
      %v335 = vunpack.c.h.b16 %v246
      %v336 = vunpack.c.l.b16 %v247
      %v337 = vunpack.c.h.b16 %v247
      %v338 = vunpack.c.l.b16 %v248
      %v339 = vunpack.c.h.b16 %v248
      %v340 = vunpack.c.l.b16 %v249
      %v341 = vunpack.c.h.b16 %v249
      %v342 = vunpack.c.l.b16 %v250
      %v343 = vunpack.c.h.b16 %v250
      %v344 = vunpack.c.l.b16 %v251
      %v345 = vunpack.c.h.b16 %v251
      %v346 = vunpack.c.l.b16 %v252
      %v347 = vunpack.c.h.b16 %v252
      %v348 = vunpack.c.l.b16 %v253
      %v349 = vunpack.c.h.b16 %v253
      %v350 = vunpack.c.l.b16 %v254
      %v351 = vunpack.c.h.b16 %v254
      %v352 = vunpack.c.l.b16 %v255
      %v353 = vunpack.c.h.b16 %v255
      %v354 = vunpack.c.l.b16 %v256
      %v355 = vunpack.c.h.b16 %v256
      %v356 = vunpack.c.l.b16 %v257
      %v357 = vunpack.c.h.b16 %v257
      %v358 = vunpack.c.l.b16 %v258
      %v359 = vunpack.c.h.b16 %v258
      %v360 = vunpack.c.l.b16 %v259
      %v361 = vunpack.c.h.b16 %v259
      %v362 = vpack.c.b16 %v332, %v330
      %v363 = vpack.c.b16 %v333, %v331
      %v364 = vpack.c.b16 %v336, %v334
      %v365 = vpack.c.b16 %v337, %v335
      %v366 = vpack.c.b16 %v340, %v338
      %v367 = vpack.c.b16 %v341, %v339
      %v368 = vpack.c.b16 %v344, %v342
      %v369 = vpack.c.b16 %v345, %v343
      %v370 = vpack.c.b16 %v348, %v346
      %v371 = vpack.c.b16 %v349, %v347
      %v372 = vpack.c.b16 %v352, %v350
      %v373 = vpack.c.b16 %v353, %v351
      %v374 = vpack.c.b16 %v356, %v354
      %v375 = vpack.c.b16 %v357, %v355
      %v376 = vpack.c.b16 %v360, %v358
      %v377 = vpack.c.b16 %v361, %v359
      %394 = vmatpush.bf16.msra.mxu0 %v376
      %395 = vmatpush.bf16.msra.mxu0 %v374
      %396 = vmatpush.bf16.msra.mxu0 %v372
      %397 = vmatpush.bf16.msra.mxu0 %v370
      %398 = vmatpush.bf16.msra.mxu0 %v368
      %399 = vmatpush.bf16.msra.mxu0 %v366
      %400 = vmatpush.bf16.msra.mxu0 %v364
      %401 = vmatpush.bf16.msra.mxu0 %v362
      %402 = vmatmul.bf16.gmra.mxu0 %v298
      %v403 = vpop.f32.mrf.mxu0
      %v404 = vadd.f32 %v262, %v403
      %v405 = vpop.f32.mrf.mxu0
      %v406 = vadd.f32 %v262, %v405
      %407 = vmatmul.bf16.gmra.mxu0 %v299
      %v408 = vpop.f32.mrf.mxu0
      %v409 = vadd.f32 %v262, %v408
      %v410 = vpop.f32.mrf.mxu0
      %v411 = vadd.f32 %v262, %v410
      %412 = vmatmul.bf16.gmra.mxu0 %v300
      %v413 = vpop.f32.mrf.mxu0
      %v414 = vadd.f32 %v262, %v413
      %v415 = vpop.f32.mrf.mxu0
      %v416 = vadd.f32 %v262, %v415
      %417 = vmatmul.bf16.gmra.mxu0 %v301
      %v418 = vpop.f32.mrf.mxu0
      %v419 = vadd.f32 %v262, %v418
      %v420 = vpop.f32.mrf.mxu0
      %v421 = vadd.f32 %v262, %v420
      %422 = vmatmul.bf16.gmra.mxu0 %v302
      %v423 = vpop.f32.mrf.mxu0
      %v424 = vadd.f32 %v262, %v423
      %v425 = vpop.f32.mrf.mxu0
      %v426 = vadd.f32 %v262, %v425
      %427 = vmatmul.bf16.gmra.mxu0 %v303
      %v428 = vpop.f32.mrf.mxu0
      %v429 = vadd.f32 %v262, %v428
      %v430 = vpop.f32.mrf.mxu0
      %v431 = vadd.f32 %v262, %v430
      %432 = vmatmul.bf16.gmra.mxu0 %v304
      %v433 = vpop.f32.mrf.mxu0
      %v434 = vadd.f32 %v262, %v433
      %v435 = vpop.f32.mrf.mxu0
      %v436 = vadd.f32 %v262, %v435
      %437 = vmatmul.bf16.gmra.mxu0 %v305
      %v438 = vpop.f32.mrf.mxu0
      %v439 = vadd.f32 %v262, %v438
      %v440 = vpop.f32.mrf.mxu0
      %v441 = vadd.f32 %v262, %v440
      %442 = vdwg.mxu0
      %443 = vmatpush.bf16.msra.mxu0 %v377
      %444 = vmatpush.bf16.msra.mxu0 %v375
      %445 = vmatpush.bf16.msra.mxu0 %v373
      %446 = vmatpush.bf16.msra.mxu0 %v371
      %447 = vmatpush.bf16.msra.mxu0 %v369
      %448 = vmatpush.bf16.msra.mxu0 %v367
      %449 = vmatpush.bf16.msra.mxu0 %v365
      %450 = vmatpush.bf16.msra.mxu0 %v363
      %451 = vmatmul.bf16.gmra.mxu0 %v298
      %v452 = vpop.f32.mrf.mxu0
      %v453 = vadd.f32 %v263, %v452
      %v454 = vpop.f32.mrf.mxu0
      %v455 = vadd.f32 %v263, %v454
      %456 = vmatmul.bf16.gmra.mxu0 %v299
      %v457 = vpop.f32.mrf.mxu0
      %v458 = vadd.f32 %v263, %v457
      %v459 = vpop.f32.mrf.mxu0
      %v460 = vadd.f32 %v263, %v459
      %461 = vmatmul.bf16.gmra.mxu0 %v300
      %v462 = vpop.f32.mrf.mxu0
      %v463 = vadd.f32 %v263, %v462
      %v464 = vpop.f32.mrf.mxu0
      %v465 = vadd.f32 %v263, %v464
      %466 = vmatmul.bf16.gmra.mxu0 %v301
      %v467 = vpop.f32.mrf.mxu0
      %v468 = vadd.f32 %v263, %v467
      %v469 = vpop.f32.mrf.mxu0
      %v470 = vadd.f32 %v263, %v469
      %471 = vmatmul.bf16.gmra.mxu0 %v302
      %v472 = vpop.f32.mrf.mxu0
      %v473 = vadd.f32 %v263, %v472
      %v474 = vpop.f32.mrf.mxu0
      %v475 = vadd.f32 %v263, %v474
      %476 = vmatmul.bf16.gmra.mxu0 %v303
      %v477 = vpop.f32.mrf.mxu0
      %v478 = vadd.f32 %v263, %v477
      %v479 = vpop.f32.mrf.mxu0
      %v480 = vadd.f32 %v263, %v479
      %481 = vmatmul.bf16.gmra.mxu0 %v304
      %v482 = vpop.f32.mrf.mxu0
      %v483 = vadd.f32 %v263, %v482
      %v484 = vpop.f32.mrf.mxu0
      %v485 = vadd.f32 %v263, %v484
      %486 = vmatmul.bf16.gmra.mxu0 %v305
      %v487 = vpop.f32.mrf.mxu0
      %v488 = vadd.f32 %v263, %v487
      %v489 = vpop.f32.mrf.mxu0
      %v490 = vadd.f32 %v263, %v489
      %491 = vdwg.mxu0
      %492 = vst [vmem:[%s226] sm:$0xff] %v453
      %493 = vst [vmem:[%s226 + $0x8] sm:$0xff] %v455
      %494 = vst [vmem:[%s226 + $0x10] sm:$0xff] %v458
      %495 = vst [vmem:[%s226 + $0x18] sm:$0xff] %v460
      %496 = vst [vmem:[%s226 + $0x20] sm:$0xff] %v463
      %497 = vst [vmem:[%s226 + $0x28] sm:$0xff] %v465
      %498 = vst [vmem:[%s226 + $0x30] sm:$0xff] %v468
      %499 = vst [vmem:[%s226 + $0x38] sm:$0xff] %v470
      %500 = vst [vmem:[%s226 + $0x40] sm:$0xff] %v473
      %501 = vst [vmem:[%s226 + $0x48] sm:$0xff] %v475
      %502 = vst [vmem:[%s226 + $0x50] sm:$0xff] %v478
      %503 = vst [vmem:[%s226 + $0x58] sm:$0xff] %v480
      %504 = vst [vmem:[%s226 + $0x60] sm:$0xff] %v483
      %505 = vst [vmem:[%s226 + $0x68] sm:$0xff] %v485
      %506 = vst [vmem:[%s226 + $0x70] sm:$0xff] %v488
      %507 = vst [vmem:[%s226 + $0x78] sm:$0xff] %v490
      %vm508 = vcmp.ge.f32.partialorder %v404, 0.0
      %vm509 = vcmp.ge.f32.partialorder %v406, 0.0
      %vm510 = vcmp.ge.f32.partialorder %v409, 0.0
      %vm511 = vcmp.ge.f32.partialorder %v411, 0.0
      %vm512 = vcmp.ge.f32.partialorder %v414, 0.0
      %vm513 = vcmp.ge.f32.partialorder %v416, 0.0
      %vm514 = vcmp.ge.f32.partialorder %v419, 0.0
      %vm515 = vcmp.ge.f32.partialorder %v421, 0.0
      %vm516 = vcmp.ge.f32.partialorder %v424, 0.0
      %vm517 = vcmp.ge.f32.partialorder %v426, 0.0
      %vm518 = vcmp.ge.f32.partialorder %v429, 0.0
      %vm519 = vcmp.ge.f32.partialorder %v431, 0.0
      %vm520 = vcmp.ge.f32.partialorder %v434, 0.0
      %vm521 = vcmp.ge.f32.partialorder %v436, 0.0
      %vm522 = vcmp.ge.f32.partialorder %v439, 0.0
      %vm523 = vcmp.ge.f32.partialorder %v441, 0.0
      %v524 = vmul.f32 %v404, 0.01
      %v525 = vmul.f32 %v406, 0.01
      %v526 = vmul.f32 %v409, 0.01
      %v527 = vmul.f32 %v411, 0.01
      %v528 = vmul.f32 %v414, 0.01
      %v529 = vmul.f32 %v416, 0.01
      %v530 = vmul.f32 %v419, 0.01
      %v531 = vmul.f32 %v421, 0.01
      %v532 = vmul.f32 %v424, 0.01
      %v533 = vmul.f32 %v426, 0.01
      %v534 = vmul.f32 %v429, 0.01
      %v535 = vmul.f32 %v431, 0.01
      %v536 = vmul.f32 %v434, 0.01
      %v537 = vmul.f32 %v436, 0.01
      %v538 = vmul.f32 %v439, 0.01
      %v539 = vmul.f32 %v441, 0.01
      %v540 = vsel %vm508, %v404, %v524
      %v541 = vsel %vm509, %v406, %v525
      %v542 = vsel %vm510, %v409, %v526
      %v543 = vsel %vm511, %v411, %v527
      %v544 = vsel %vm512, %v414, %v528
      %v545 = vsel %vm513, %v416, %v529
      %v546 = vsel %vm514, %v419, %v530
      %v547 = vsel %vm515, %v421, %v531
      %v548 = vsel %vm516, %v424, %v532
      %v549 = vsel %vm517, %v426, %v533
      %v550 = vsel %vm518, %v429, %v534
      %v551 = vsel %vm519, %v431, %v535
      %v552 = vsel %vm520, %v434, %v536
      %v553 = vsel %vm521, %v436, %v537
      %v554 = vsel %vm522, %v439, %v538
      %v555 = vsel %vm523, %v441, %v539
      %v556 = vpack.c.bf16 %v541, %v540
      %v557 = vpack.c.bf16 %v543, %v542
      %v558 = vpack.c.bf16 %v545, %v544
      %v559 = vpack.c.bf16 %v547, %v546
      %v560 = vpack.c.bf16 %v549, %v548
      %v561 = vpack.c.bf16 %v551, %v550
      %v562 = vpack.c.bf16 %v553, %v552
      %v563 = vpack.c.bf16 %v555, %v554
      %v564 = vld [vmem:[%s2] sm:$0xf]
      %v565 = vld [vmem:[%s2 + $0x4] sm:$0xf]
      %v566 = vld [vmem:[%s2 + $0x8] sm:$0xf]
      %v567 = vld [vmem:[%s2 + $0xc] sm:$0xf]
      %v568 = vld [vmem:[%s2 + $0x10] sm:$0xf]
      %v569 = vld [vmem:[%s2 + $0x14] sm:$0xf]
      %v570 = vld [vmem:[%s2 + $0x18] sm:$0xf]
      %v571 = vld [vmem:[%s2 + $0x1c] sm:$0xf]
      %v572 = vld [vmem:[%s2 + $0x20] sm:$0xf]
      %v573 = vld [vmem:[%s2 + $0x24] sm:$0xf]
      %v574 = vld [vmem:[%s2 + $0x28] sm:$0xf]
      %v575 = vld [vmem:[%s2 + $0x2c] sm:$0xf]
      %v576 = vld [vmem:[%s2 + $0x30] sm:$0xf]
      %v577 = vld [vmem:[%s2 + $0x34] sm:$0xf]
      %v578 = vld [vmem:[%s2 + $0x38] sm:$0xf]
      %v579 = vld [vmem:[%s2 + $0x3c] sm:$0xf]
      %v580 = vld [vmem:[%s4 + $0x1] ss:$0 sm:$0xff]
      %v597 = vunpack.c.l.b16 %v564
      %v598 = vunpack.c.l.b16 %v565
      %v599 = vunpack.c.l.b16 %v566
      %v600 = vunpack.c.l.b16 %v567
      %v601 = vunpack.c.l.b16 %v568
      %v602 = vunpack.c.l.b16 %v569
      %v603 = vunpack.c.l.b16 %v570
      %v604 = vunpack.c.l.b16 %v571
      %v605 = vunpack.c.l.b16 %v572
      %v606 = vunpack.c.l.b16 %v573
      %v607 = vunpack.c.l.b16 %v574
      %v608 = vunpack.c.l.b16 %v575
      %v609 = vunpack.c.l.b16 %v576
      %v610 = vunpack.c.l.b16 %v577
      %v611 = vunpack.c.l.b16 %v578
      %v612 = vunpack.c.l.b16 %v579
      %v613 = vpack.c.b16 %v598, %v597
      %v614 = vpack.c.b16 %v600, %v599
      %v615 = vpack.c.b16 %v602, %v601
      %v616 = vpack.c.b16 %v604, %v603
      %v617 = vpack.c.b16 %v606, %v605
      %v618 = vpack.c.b16 %v608, %v607
      %v619 = vpack.c.b16 %v610, %v609
      %v620 = vpack.c.b16 %v612, %v611
      %629 = vmatpush.bf16.msra.mxu0 %v620
      %630 = vmatpush.bf16.msra.mxu0 %v619
      %631 = vmatpush.bf16.msra.mxu0 %v618
      %632 = vmatpush.bf16.msra.mxu0 %v617
      %633 = vmatpush.bf16.msra.mxu0 %v616
      %634 = vmatpush.bf16.msra.mxu0 %v615
      %635 = vmatpush.bf16.msra.mxu0 %v614
      %636 = vmatpush.bf16.msra.mxu0 %v613
      %637 = vmatmul.bf16.gmra.mxu0 %v556
      %v638 = vpop.f32.mrf.mxu0
      %v639 = vadd.f32 %v580, %v638
      %v640 = vpop.f32.mrf.mxu0
      %v641 = vadd.f32 %v580, %v640
      %642 = vmatmul.bf16.gmra.mxu0 %v557
      %v643 = vpop.f32.mrf.mxu0
      %v644 = vadd.f32 %v580, %v643
      %v645 = vpop.f32.mrf.mxu0
      %v646 = vadd.f32 %v580, %v645
      %647 = vmatmul.bf16.gmra.mxu0 %v558
      %v648 = vpop.f32.mrf.mxu0
      %v649 = vadd.f32 %v580, %v648
      %v650 = vpop.f32.mrf.mxu0
      %v651 = vadd.f32 %v580, %v650
      %652 = vmatmul.bf16.gmra.mxu0 %v559
      %v653 = vpop.f32.mrf.mxu0
      %v654 = vadd.f32 %v580, %v653
      %v655 = vpop.f32.mrf.mxu0
      %v656 = vadd.f32 %v580, %v655
      %657 = vmatmul.bf16.gmra.mxu0 %v560
      %v658 = vpop.f32.mrf.mxu0
      %v659 = vadd.f32 %v580, %v658
      %v660 = vpop.f32.mrf.mxu0
      %v661 = vadd.f32 %v580, %v660
      %662 = vmatmul.bf16.gmra.mxu0 %v561
      %v663 = vpop.f32.mrf.mxu0
      %v664 = vadd.f32 %v580, %v663
      %v665 = vpop.f32.mrf.mxu0
      %v666 = vadd.f32 %v580, %v665
      %667 = vmatmul.bf16.gmra.mxu0 %v562
      %v668 = vpop.f32.mrf.mxu0
      %v669 = vadd.f32 %v580, %v668
      %v670 = vpop.f32.mrf.mxu0
      %v671 = vadd.f32 %v580, %v670
      %672 = vmatmul.bf16.gmra.mxu0 %v563
      %v673 = vpop.f32.mrf.mxu0
      %v674 = vadd.f32 %v580, %v673
      %v675 = vpop.f32.mrf.mxu0
      %v676 = vadd.f32 %v580, %v675
      %677 = vdwg.mxu0
      %vm678 = vcmp.ge.f32.partialorder %v639, 0.0
      %vm679 = vcmp.ge.f32.partialorder %v641, 0.0
      %vm680 = vcmp.ge.f32.partialorder %v644, 0.0
      %vm681 = vcmp.ge.f32.partialorder %v646, 0.0
      %vm682 = vcmp.ge.f32.partialorder %v649, 0.0
      %vm683 = vcmp.ge.f32.partialorder %v651, 0.0
      %vm684 = vcmp.ge.f32.partialorder %v654, 0.0
      %vm685 = vcmp.ge.f32.partialorder %v656, 0.0
      %vm686 = vcmp.ge.f32.partialorder %v659, 0.0
      %vm687 = vcmp.ge.f32.partialorder %v661, 0.0
      %vm688 = vcmp.ge.f32.partialorder %v664, 0.0
      %vm689 = vcmp.ge.f32.partialorder %v666, 0.0
      %vm690 = vcmp.ge.f32.partialorder %v669, 0.0
      %vm691 = vcmp.ge.f32.partialorder %v671, 0.0
      %vm692 = vcmp.ge.f32.partialorder %v674, 0.0
      %vm693 = vcmp.ge.f32.partialorder %v676, 0.0
      %v694 = vmul.f32 %v639, 0.01
      %v695 = vmul.f32 %v641, 0.01
      %v696 = vmul.f32 %v644, 0.01
      %v697 = vmul.f32 %v646, 0.01
      %v698 = vmul.f32 %v649, 0.01
      %v699 = vmul.f32 %v651, 0.01
      %v700 = vmul.f32 %v654, 0.01
      %v701 = vmul.f32 %v656, 0.01
      %v702 = vmul.f32 %v659, 0.01
      %v703 = vmul.f32 %v661, 0.01
      %v704 = vmul.f32 %v664, 0.01
      %v705 = vmul.f32 %v666, 0.01
      %v706 = vmul.f32 %v669, 0.01
      %v707 = vmul.f32 %v671, 0.01
      %v708 = vmul.f32 %v674, 0.01
      %v709 = vmul.f32 %v676, 0.01
      %v710 = vsel %vm678, %v639, %v694
      %v711 = vsel %vm679, %v641, %v695
      %v712 = vsel %vm680, %v644, %v696
      %v713 = vsel %vm681, %v646, %v697
      %v714 = vsel %vm682, %v649, %v698
      %v715 = vsel %vm683, %v651, %v699
      %v716 = vsel %vm684, %v654, %v700
      %v717 = vsel %vm685, %v656, %v701
      %v718 = vsel %vm686, %v659, %v702
      %v719 = vsel %vm687, %v661, %v703
      %v720 = vsel %vm688, %v664, %v704
      %v721 = vsel %vm689, %v666, %v705
      %v722 = vsel %vm690, %v669, %v706
      %v723 = vsel %vm691, %v671, %v707
      %v724 = vsel %vm692, %v674, %v708
      %v725 = vsel %vm693, %v676, %v709
      %v726 = vld [vmem:[%s226] sm:$0xff]
      %v727 = vld [vmem:[%s226 + $0x8] sm:$0xff]
      %v728 = vld [vmem:[%s226 + $0x10] sm:$0xff]
      %v729 = vld [vmem:[%s226 + $0x18] sm:$0xff]
      %v730 = vld [vmem:[%s226 + $0x20] sm:$0xff]
      %v731 = vld [vmem:[%s226 + $0x28] sm:$0xff]
      %v732 = vld [vmem:[%s226 + $0x30] sm:$0xff]
      %v733 = vld [vmem:[%s226 + $0x38] sm:$0xff]
      %v734 = vld [vmem:[%s226 + $0x40] sm:$0xff]
      %v735 = vld [vmem:[%s226 + $0x48] sm:$0xff]
      %v736 = vld [vmem:[%s226 + $0x50] sm:$0xff]
      %v737 = vld [vmem:[%s226 + $0x58] sm:$0xff]
      %v738 = vld [vmem:[%s226 + $0x60] sm:$0xff]
      %v739 = vld [vmem:[%s226 + $0x68] sm:$0xff]
      %v740 = vld [vmem:[%s226 + $0x70] sm:$0xff]
      %v741 = vld [vmem:[%s226 + $0x78] sm:$0xff]
      %v742 = vpack.c.bf16 %v711, %v710
      %v743 = vpack.c.bf16 %v713, %v712
      %v744 = vpack.c.bf16 %v715, %v714
      %v745 = vpack.c.bf16 %v717, %v716
      %v746 = vpack.c.bf16 %v719, %v718
      %v747 = vpack.c.bf16 %v721, %v720
      %v748 = vpack.c.bf16 %v723, %v722
      %v749 = vpack.c.bf16 %v725, %v724
      %v750 = vld [vmem:[%s3] sm:$0xf]
      %v751 = vld [vmem:[%s3 + $0x4] sm:$0xf]
      %v752 = vld [vmem:[%s3 + $0x8] sm:$0xf]
      %v753 = vld [vmem:[%s3 + $0xc] sm:$0xf]
      %v754 = vld [vmem:[%s3 + $0x10] sm:$0xf]
      %v755 = vld [vmem:[%s3 + $0x14] sm:$0xf]
      %v756 = vld [vmem:[%s3 + $0x18] sm:$0xf]
      %v757 = vld [vmem:[%s3 + $0x1c] sm:$0xf]
      %v758 = vld [vmem:[%s3 + $0x20] sm:$0xf]
      %v759 = vld [vmem:[%s3 + $0x24] sm:$0xf]
      %v760 = vld [vmem:[%s3 + $0x28] sm:$0xf]
      %v761 = vld [vmem:[%s3 + $0x2c] sm:$0xf]
      %v762 = vld [vmem:[%s3 + $0x30] sm:$0xf]
      %v763 = vld [vmem:[%s3 + $0x34] sm:$0xf]
      %v764 = vld [vmem:[%s3 + $0x38] sm:$0xf]
      %v765 = vld [vmem:[%s3 + $0x3c] sm:$0xf]
      %v766 = vld [vmem:[%s4 + $0x2] ss:$0 sm:$0xff]
      %v783 = vunpack.c.l.b16 %v750
      %v784 = vunpack.c.l.b16 %v751
      %v785 = vunpack.c.l.b16 %v752
      %v786 = vunpack.c.l.b16 %v753
      %v787 = vunpack.c.l.b16 %v754
      %v788 = vunpack.c.l.b16 %v755
      %v789 = vunpack.c.l.b16 %v756
      %v790 = vunpack.c.l.b16 %v757
      %v791 = vunpack.c.l.b16 %v758
      %v792 = vunpack.c.l.b16 %v759
      %v793 = vunpack.c.l.b16 %v760
      %v794 = vunpack.c.l.b16 %v761
      %v795 = vunpack.c.l.b16 %v762
      %v796 = vunpack.c.l.b16 %v763
      %v797 = vunpack.c.l.b16 %v764
      %v798 = vunpack.c.l.b16 %v765
      %v799 = vpack.c.b16 %v784, %v783
      %v800 = vpack.c.b16 %v786, %v785
      %v801 = vpack.c.b16 %v788, %v787
      %v802 = vpack.c.b16 %v790, %v789
      %v803 = vpack.c.b16 %v792, %v791
      %v804 = vpack.c.b16 %v794, %v793
      %v805 = vpack.c.b16 %v796, %v795
      %v806 = vpack.c.b16 %v798, %v797
      %815 = vmatpush.bf16.msra.mxu0 %v806
      %816 = vmatpush.bf16.msra.mxu0 %v805
      %817 = vmatpush.bf16.msra.mxu0 %v804
      %818 = vmatpush.bf16.msra.mxu0 %v803
      %819 = vmatpush.bf16.msra.mxu0 %v802
      %820 = vmatpush.bf16.msra.mxu0 %v801
      %821 = vmatpush.bf16.msra.mxu0 %v800
      %822 = vmatpush.bf16.msra.mxu0 %v799
      %823 = vmatmul.bf16.gmra.mxu0 %v742
      %v824 = vpop.f32.mrf.mxu0
      %v825 = vadd.f32 %v766, %v824
      %v826 = vpop.f32.mrf.mxu0
      %v827 = vadd.f32 %v766, %v826
      %828 = vmatmul.bf16.gmra.mxu0 %v743
      %v829 = vpop.f32.mrf.mxu0
      %v830 = vadd.f32 %v766, %v829
      %v831 = vpop.f32.mrf.mxu0
      %v832 = vadd.f32 %v766, %v831
      %833 = vmatmul.bf16.gmra.mxu0 %v744
      %v834 = vpop.f32.mrf.mxu0
      %v835 = vadd.f32 %v766, %v834
      %v836 = vpop.f32.mrf.mxu0
      %v837 = vadd.f32 %v766, %v836
      %838 = vmatmul.bf16.gmra.mxu0 %v745
      %v839 = vpop.f32.mrf.mxu0
      %v840 = vadd.f32 %v766, %v839
      %v841 = vpop.f32.mrf.mxu0
      %v842 = vadd.f32 %v766, %v841
      %843 = vmatmul.bf16.gmra.mxu0 %v746
      %v844 = vpop.f32.mrf.mxu0
      %v845 = vadd.f32 %v766, %v844
      %v846 = vpop.f32.mrf.mxu0
      %v847 = vadd.f32 %v766, %v846
      %848 = vmatmul.bf16.gmra.mxu0 %v747
      %v849 = vpop.f32.mrf.mxu0
      %v850 = vadd.f32 %v766, %v849
      %v851 = vpop.f32.mrf.mxu0
      %v852 = vadd.f32 %v766, %v851
      %853 = vmatmul.bf16.gmra.mxu0 %v748
      %v854 = vpop.f32.mrf.mxu0
      %v855 = vadd.f32 %v766, %v854
      %v856 = vpop.f32.mrf.mxu0
      %v857 = vadd.f32 %v766, %v856
      %858 = vmatmul.bf16.gmra.mxu0 %v749
      %v859 = vpop.f32.mrf.mxu0
      %v860 = vadd.f32 %v766, %v859
      %v861 = vpop.f32.mrf.mxu0
      %v862 = vadd.f32 %v766, %v861
      %863 = vdwg.mxu0
      %v864 = vadd.f32 %v726, %v825
      %v865 = vadd.f32 %v727, %v827
      %v866 = vadd.f32 %v728, %v830
      %v867 = vadd.f32 %v729, %v832
      %v868 = vadd.f32 %v730, %v835
      %v869 = vadd.f32 %v731, %v837
      %v870 = vadd.f32 %v732, %v840
      %v871 = vadd.f32 %v733, %v842
      %v872 = vadd.f32 %v734, %v845
      %v873 = vadd.f32 %v735, %v847
      %v874 = vadd.f32 %v736, %v850
      %v875 = vadd.f32 %v737, %v852
      %v876 = vadd.f32 %v738, %v855
      %v877 = vadd.f32 %v739, %v857
      %v878 = vadd.f32 %v740, %v860
      %v879 = vadd.f32 %v741, %v862
      %880 = vst [vmem:[%s226] sm:$0xff] %v864
      %881 = vst [vmem:[%s226 + $0x8] sm:$0xff] %v865
      %882 = vst [vmem:[%s226 + $0x10] sm:$0xff] %v866
      %883 = vst [vmem:[%s226 + $0x18] sm:$0xff] %v867
      %884 = vst [vmem:[%s226 + $0x20] sm:$0xff] %v868
      %885 = vst [vmem:[%s226 + $0x28] sm:$0xff] %v869
      %886 = vst [vmem:[%s226 + $0x30] sm:$0xff] %v870
      %887 = vst [vmem:[%s226 + $0x38] sm:$0xff] %v871
      %888 = vst [vmem:[%s226 + $0x40] sm:$0xff] %v872
      %889 = vst [vmem:[%s226 + $0x48] sm:$0xff] %v873
      %890 = vst [vmem:[%s226 + $0x50] sm:$0xff] %v874
      %891 = vst [vmem:[%s226 + $0x58] sm:$0xff] %v875
      %892 = vst [vmem:[%s226 + $0x60] sm:$0xff] %v876
      %893 = vst [vmem:[%s226 + $0x68] sm:$0xff] %v877
      %894 = vst [vmem:[%s226 + $0x70] sm:$0xff] %v878
      %895 = vst [vmem:[%s226 + $0x78] sm:$0xff] %v879
      %s896 = smul.u32 16, %s16
      %p897 = scmp.lt.s32.totalorder %s896, 31
      %s898 = scalar_select %p897, %s896, 31
      %s899 = smul.addr %s898, 8
      %s900 = scalar_lea.vmem %s5, %s899
      // Predicated region
      $region41: #{leafgeo_forward.1} parent=39 // pred_check
        %p901 = pneg %p144
      $region42: #{leafgeo_forward.1} parent=39 // pred_check_branch
        %903 = sbr.rel (%p901) target = $region44
      $region43: #{leafgeo_forward.1} parent=39 // pred_region
        %s904 = smul.u32 16, %s16
      $region44: #{leafgeo_forward.1} parent=39 // pred_fallthru
        _
    $region40: #{leafgeo_forward.1} parent=5 // pred_fallthru
      _
    %p905 = scmp.le.s32.totalorder 2, %s11
    // Predicated region
    $region45: #{leafgeo_forward.1} parent=5 // pred_check
      %p906 = pneg %p905
    $region46: #{leafgeo_forward.1} parent=5 // pred_check_branch
      %908 = sbr.rel (%p906) target = $region48
    $region47: #{leafgeo_forward.1} parent=5 // pred_region
      %s909 = ssub.s32 %s11, 2
      // Predicated region
      $region49: #{leafgeo_forward.1} parent=47 // pred_check
        %p910 = pneg %p150
      $region50: #{leafgeo_forward.1} parent=47 // pred_check_branch
        %912 = sbr.rel (%p910) target = $region52
      $region51: #{leafgeo_forward.1} parent=47 // pred_region
        %s913 = smul.u32 16, %s17
        %p914 = scmp.lt.s32.totalorder %s913, 31
        %s915 = scalar_select %p914, %s913, 31
        %s916 = smul.addr %s915, 8
        %s917 = scalar_lea.vmem %s5, %s916
      $region52: #{leafgeo_forward.1} parent=47 // pred_fallthru
        _
    $region48: #{leafgeo_forward.1} parent=5 // pred_fallthru
      _
  $region6: #{leafgeo_forward.1} parent=0 // loop_footer
    %s15 = sadd.s32 1, %s11
  $region7: #{leafgeo_forward.1} parent=0 // loop_footer_branch
    %10 = sbr.rel target = $region3
  $region8: #{leafgeo_forward.1} parent=0 // loop_exit
    _

</llo_original>
